<compile_context>
chip_gen: v7x
topology: tpu7x:2x2x1
jax: 0.10.0
libtpu: 0.0.40
codegen_flags: <defaults>
</compile_context>

<pallas_src>
from functools import partial  # noqa: F401  (kept for parity with common kernel scaffolding)

import jax
import jax.numpy as jnp
from jax.experimental import pallas as pl
from jax.experimental.pallas import tpu as pltpu


def _fused_conv_pool_kernel(pt_ref, wt_ref, o_ref):
    """One grid step = one image.

    pt_ref: (1, Dp, Mo)  bf16  stride-2 im2col patches^T (contraction on sublanes,
                               output-spatial Ho*Wo on the 128-lane axis)
    wt_ref: (Cout, Dp)   bf16  fused (conv o meanpool) weights^T, bias folded in
    o_ref : (1, Cout, Mo) f32  pooled output, transposed (reshapes straight to NCHW)
    """
    o_ref[0] = jnp.dot(wt_ref[...], pt_ref[0], preferred_element_type=jnp.float32)


def conv_mean_pool(x_nchw, weight, bias):
    """Matches ConvMeanPool.forward: Conv2d(stride=1, pad=(k-1)//2, bias) then 2x2 mean pool.

    x_nchw : (N, Cin, H, W)    float32
    weight : (Cout, Cin, K, K) float32 (PyTorch OIHW)
    bias   : (Cout,)           float32
    returns: (N, Cout, H//2, W//2) float32
    """
    N, Cin, H, W = x_nchw.shape
    Cout, Cin_w, K, K2 = weight.shape
    assert Cin == Cin_w and K == K2 and H % 2 == 0 and W % 2 == 0
    pad = (K - 1) // 2
    Ho, Wo = H // 2, W // 2
    Ke = K + 1                        # fused (conv o meanpool) kernel size
    Mo = Ho * Wo
    D = Ke * Ke * Cin + 1             # im2col depth (+1 = bias column)
    Dp = ((D + 15) // 16) * 16        # align contraction dim to bf16 sublane packing

    # ---- fold the 2x2 mean pool (and bias) into the conv weights: done once, constant size ----
    w = weight.astype(jnp.float32)
    w_eff = 0.25 * (jnp.pad(w, ((0, 0), (0, 0), (0, 1), (0, 1)))     # shift (a,b)=(0,0)
                    + jnp.pad(w, ((0, 0), (0, 0), (1, 0), (0, 1)))   # (1,0)
                    + jnp.pad(w, ((0, 0), (0, 0), (0, 1), (1, 0)))   # (0,1)
                    + jnp.pad(w, ((0, 0), (0, 0), (1, 0), (1, 0))))  # (1,1)  -> (Cout,Cin,Ke,Ke)
    wt = jnp.transpose(w_eff, (0, 2, 3, 1)).reshape(Cout, Ke * Ke * Cin)   # cols (u,v,ci)-major
    wt = jnp.concatenate([wt, bias.astype(jnp.float32)[:, None]], axis=1)  # bias column
    wt = jnp.pad(wt, ((0, 0), (0, Dp - D))).astype(jnp.bfloat16)           # (Cout, Dp)

    # ---- stride-2 im2col (pure layout plumbing / gathers; all arithmetic stays in the kernel) --
    x = jnp.transpose(x_nchw, (0, 2, 3, 1)).astype(jnp.float32)            # NHWC
    xp = jnp.pad(x, ((0, 0), (pad, pad), (pad, pad), (0, 0)))              # (N, H+K-1, W+K-1, Cin)
    taps = [xp[:, u::2, v::2, :][:, :Ho, :Wo, :]                           # tap (u,v), stride 2
            for u in range(Ke) for v in range(Ke)]
    pats = jnp.concatenate(taps + [jnp.ones((N, Ho, Wo, 1), jnp.float32)], axis=-1)  # (N,Ho,Wo,D)
    pats_t = jnp.transpose(pats.reshape(N, Mo, D), (0, 2, 1))              # (N, D, Mo)
    pats_t = jnp.pad(pats_t, ((0, 0), (0, Dp - D), (0, 0))).astype(jnp.bfloat16)

    out_t = pl.pallas_call(
        _fused_conv_pool_kernel,
        out_shape=jax.ShapeDtypeStruct((N, Cout, Mo), jnp.float32),
        grid_spec=pltpu.PrefetchScalarGridSpec(
            num_scalar_prefetch=0,
            grid=(N,),
            in_specs=[
                pl.BlockSpec((1, Dp, Mo), lambda n: (n, 0, 0)),    # per-image patches^T
                pl.BlockSpec((Cout, Dp), lambda n: (0, 0)),        # shared fused weights
            ],
            out_specs=pl.BlockSpec((1, Cout, Mo), lambda n: (n, 0, 0)),
        ),
        compiler_params=pltpu.CompilerParams(
            dimension_semantics=("parallel",),   # >=2 parallel steps -> both v7x TCs busy
        ),
    )(pats_t, wt)

    return out_t.reshape(N, Cout, Ho, Wo)        # already NCHW; no final transpose needed


if __name__ == "__main__":
    key = jax.random.PRNGKey(0)
    kx, kw, kb = jax.random.split(key, 3)

    # Small shapes consistent with the module: n_input=4, n_output=8, k_size=3.
    N, Cin, H, W = 2, 4, 16, 16
    Cout, K = 8, 3

    x = jax.random.normal(kx, (N, Cin, H, W), jnp.float32)
    # Deterministic PyTorch-style uniform init, bound 1/sqrt(fan_in).
    bound = 1.0 / (Cin * K * K) ** 0.5
    weight = jax.random.uniform(kw, (Cout, Cin, K, K), jnp.float32, -bound, bound)
    bias = jax.random.uniform(kb, (Cout,), jnp.float32, -bound, bound)

    out = jax.block_until_ready(conv_mean_pool(x, weight, bias))

    # Pure-JAX f32 reference with identical semantics to the PyTorch module.
    pad = (K - 1) // 2
    conv = jax.lax.conv_general_dilated(
        x, weight, window_strides=(1, 1), padding=((pad, pad), (pad, pad)),
        dimension_numbers=("NCHW", "OIHW", "NCHW"),
        precision=jax.lax.Precision.HIGHEST)
    conv = conv + bias[None, :, None, None]
    ref = (conv[:, :, ::2, ::2] + conv[:, :, 1::2, ::2]
           + conv[:, :, ::2, 1::2] + conv[:, :, 1::2, 1::2]) / 4.0

    assert out.shape == (N, Cout, H // 2, W // 2), out.shape
    max_err = float(jnp.max(jnp.abs(out - ref)))
    # bf16 operands with f32 accumulation: 2e-2 tolerance is comfortably loose.
    assert jnp.allclose(out, ref, rtol=2e-2, atol=2e-2), max_err
    print("KERNEL_OK")
</pallas_src>

<mosaic_0001>
module attributes {stable_mosaic.version = 11 : i64} {
  func.func @_fused_conv_pool_kernel(%arg0: i32, %arg1: memref<1x80x64xbf16, #tpu.memory_space<vmem>>, %arg2: memref<8x80xbf16, #tpu.memory_space<vmem>>, %arg3: memref<1x8x64xf32, #tpu.memory_space<vmem>>) attributes {dimension_semantics = [#tpu.dimension_semantics<parallel>], iteration_bounds = array<i64: 2>, scalar_prefetch = 0 : i64, scratch_operands = 0 : i64, tpu.core_type = #tpu.core_type<tc>, window_params = [{transform_indices = @transform_0, window_bounds = array<i64: 1, 80, 64>}, {pipeline_mode = #tpu.pipeline_mode<synchronous>, transform_indices = @transform_1, window_bounds = array<i64: 8, 80>}, {transform_indices = @transform_2, window_bounds = array<i64: 1, 8, 64>}]} {
    %c0 = arith.constant 0 : index
    %c0_0 = arith.constant 0 : index
    %0 = vector.load %arg2[%c0, %c0_0] : memref<8x80xbf16, #tpu.memory_space<vmem>>, vector<8x80xbf16>
    %c0_1 = arith.constant 0 : index
    %c0_2 = arith.constant 0 : index
    %c0_3 = arith.constant 0 : index
    %1 = vector.load %arg1[%c0_1, %c0_2, %c0_3] : memref<1x80x64xbf16, #tpu.memory_space<vmem>>, vector<1x80x64xbf16>
    %2 = vector.shape_cast %1 : vector<1x80x64xbf16> to vector<80x64xbf16>
    %cst = arith.constant dense<0.000000e+00> : vector<8x64xf32>
    %3 = tpu.matmul %0, %2, %cst {dimension_numbers = #tpu.dot_dimension_numbers<[1], [0], [0], [1], [0, 0, 1, 1], [], []>} : vector<8x80xbf16>, vector<80x64xbf16>, vector<8x64xf32> -> vector<8x64xf32>
    %c0_4 = arith.constant 0 : index
    %c0_5 = arith.constant 0 : index
    %c0_6 = arith.constant 0 : index
    %4 = vector.load %arg3[%c0_4, %c0_5, %c0_6] : memref<1x8x64xf32, #tpu.memory_space<vmem>>, vector<1x8x64xf32>
    %5 = vector.shape_cast %4 : vector<1x8x64xf32> to vector<8x64xf32>
    %6 = vector.shape_cast %3 : vector<8x64xf32> to vector<1x8x64xf32>
    tpu.vector_store %arg3[%c0_4, %c0_5, %c0_6], %6 {strides = array<i32>} : memref<1x8x64xf32, #tpu.memory_space<vmem>>, vector<1x8x64xf32>,
    return
  }
  func.func @transform_0(%arg0: i32) -> (i32, i32, i32) {
    %c0_i32 = arith.constant 0 : i32
    %c0_i32_0 = arith.constant 0 : i32
    %c0_i32_1 = arith.constant 0 : i32
    return %arg0, %c0_i32, %c0_i32_0 : i32, i32, i32
  }
  func.func @transform_1(%arg0: i32) -> (i32, i32) {
    %c0_i32 = arith.constant 0 : i32
    %c0_i32_0 = arith.constant 0 : i32
    %c0_i32_1 = arith.constant 0 : i32
    return %c0_i32, %c0_i32_0 : i32, i32
  }
  func.func @transform_2(%arg0: i32) -> (i32, i32, i32) {
    %c0_i32 = arith.constant 0 : i32
    %c0_i32_0 = arith.constant 0 : i32
    %c0_i32_1 = arith.constant 0 : i32
    return %arg0, %c0_i32, %c0_i32_0 : i32, i32, i32
  }
}

</mosaic_0001>

<llo_original>
// kernel: tpu_custom_call.1
$region0: #{tpu_custom_call.1}
  #allocation0 [shape = 'u32[]', space=smem, size = 0x4, offset = 0x4, fixed_abs, tag = 'smem constant byte address 0x4 - core index']
  #allocation1 [shape = 'u32[144,128]{1,0:T(1,128)}', space=vmem, size = 0x12000, scoped, tag = 'internal scratch']
  %s0 = inlined_call_operand.vmem [shape: bf16[2,80,64], index: 0, kind: input, shape index: {}]
  %s1 = inlined_call_operand.vmem [shape: bf16[8,80], index: 1, kind: input, shape index: {}]
  %s2 = inlined_call_operand.hbm [shape: f32[2,8,64], index: 2, kind: output, shape index: {}]
  %s3 = sld [smem:[#allocation0]]
  $region41: #{tpu_custom_call.1} parent=0
    _
  %s5 = ssub.s32 1, %s3
  %s6 = scalar_select 0, %s5, %s3
  $region1: #{tpu_custom_call.1} parent=0
    #allocation2 [shape = 'u8[8192]{0}', space=vmem, size = 0x2000, scoped, tag = 'output window, operand 0']
    #allocation3 [shape = 's32[2]{0}', space=sflag, size = 0x8, scoped, tag = 'scoped memory for tpu_custom_call.1']
    %7 = vsyncpa [#allocation3], 0
    %s8 = scalar_lea.sflag [#allocation3], 1
    %9 = vsyncpa %s8, 0
    loop: start=0, step=1, limit=4
    $region2: #{tpu_custom_call.1} parent=1 // loop_pre_header
      _
    $region3: #{tpu_custom_call.1} parent=1 // loop_header
      %s11 = sphi 0, %s15
      %p12 = scmp.ge.s32.totalorder %s11, 4
      %s21 = sphi 0, %s23
      %s24 = sphi 0, %s21
      %s25 = sphi 0, %s24
      %s41 = sphi 0, %s25
      %s45 = sphi 0, %s45
      %s47 = sphi 0, %s45
      %s48 = sphi 0, %s47
      %s62 = sphi 0, %s48
      %s68 = sphi 0, %s70
      %s71 = sphi 0, %s68
      %s72 = sphi 0, %s71
      %s88 = sphi 0, %s72
    $region4: #{tpu_custom_call.1} parent=1 // loop_header_branch
      %14 = sbr.rel (%p12) target = $region8
    $region5: #{tpu_custom_call.1} parent=1 // loop_body
      %s16 = ssub.s32 %s11, 1
      %s17 = ssub.s32 %s11, 2
      %s18 = sadd.s32 %s11, 1
      %s19 = ssub.s32 %s11, %s18
      %p20 = scmp.eq.s32.totalorder %s19, 0
      %s22 = sadd.s32 %s21, 1
      %s23 = scalar_select %p20, %s21, %s22
      %p26 = pneg %p20
      %p27 = scmp.eq.s32.totalorder %s11, 1
      %p28 = por %p26, %p27
      %p29 = scmp.ne.s32.totalorder %s21, %s24
      %p30 = scmp.eq.s32.totalorder %s11, 0
      %p31 = por %p29, %p30
      %p32 = scmp.ne.s32.totalorder %s21, %s24
      %p33 = scmp.eq.s32.totalorder %s16, 1
      %p34 = por %p32, %p33
      %p35 = scmp.ne.s32.totalorder %s24, %s25
      %p36 = scmp.eq.s32.totalorder %s16, 0
      %p37 = por %p35, %p36
      %p38 = scmp.ne.s32.totalorder %s24, %s25
      %p39 = scmp.eq.s32.totalorder %s17, 1
      %p40 = por %p38, %p39
      %p42 = scmp.ne.s32.totalorder %s25, %s41
      %p43 = scmp.eq.s32.totalorder %s17, 0
      %p44 = por %p42, %p43
      %s46 = sadd.s32 %s45, 1
      %p49 = scmp.eq.s32.totalorder %s11, 1
      %p50 = scmp.ne.s32.totalorder %s45, %s47
      %p51 = scmp.eq.s32.totalorder %s11, 0
      %p52 = por %p50, %p51
      %p53 = scmp.ne.s32.totalorder %s45, %s47
      %p54 = scmp.eq.s32.totalorder %s16, 1
      %p55 = por %p53, %p54
      %p56 = scmp.ne.s32.totalorder %s47, %s48
      %p57 = scmp.eq.s32.totalorder %s16, 0
      %p58 = por %p56, %p57
      %p59 = scmp.ne.s32.totalorder %s47, %s48
      %p60 = scmp.eq.s32.totalorder %s17, 1
      %p61 = por %p59, %p60
      %p63 = scmp.ne.s32.totalorder %s48, %s62
      %p64 = scmp.eq.s32.totalorder %s17, 0
      %p65 = por %p63, %p64
      %s66 = ssub.s32 %s11, %s18
      %p67 = scmp.eq.s32.totalorder %s66, 0
      %s69 = sadd.s32 %s68, 1
      %s70 = scalar_select %p67, %s68, %s69
      %p73 = pneg %p67
      %p74 = scmp.eq.s32.totalorder %s11, 1
      %p75 = por %p73, %p74
      %p76 = scmp.ne.s32.totalorder %s68, %s71
      %p77 = scmp.eq.s32.totalorder %s11, 0
      %p78 = por %p76, %p77
      %p79 = scmp.ne.s32.totalorder %s68, %s71
      %p80 = scmp.eq.s32.totalorder %s16, 1
      %p81 = por %p79, %p80
      %p82 = scmp.ne.s32.totalorder %s71, %s72
      %p83 = scmp.eq.s32.totalorder %s16, 0
      %p84 = por %p82, %p83
      %p85 = scmp.ne.s32.totalorder %s71, %s72
      %p86 = scmp.eq.s32.totalorder %s17, 1
      %p87 = por %p85, %p86
      %p89 = scmp.ne.s32.totalorder %s72, %s88
      %p90 = scmp.eq.s32.totalorder %s17, 0
      %p91 = por %p89, %p90
      %p92 = scmp.le.s32.totalorder 1, %s11
      %p93 = scmp.lt.s32.totalorder %s11, 3
      %p94 = pnand %p92, %p93
      %p95 = pneg %p94
      // Predicated region
      $region9: #{tpu_custom_call.1} parent=5 // pred_check
        _
      $region10: #{tpu_custom_call.1} parent=5 // pred_check_branch
        %97 = sbr.rel (%p94) target = $region12
      $region11: #{tpu_custom_call.1} parent=5 // pred_region
        %s98 = ssub.s32 %s11, 1
        // Predicated region
        $region13: #{tpu_custom_call.1} parent=11 // pred_check
          %p99 = pneg %p58
        $region14: #{tpu_custom_call.1} parent=11 // pred_check_branch
          %101 = sbr.rel (%p99) target = $region16
        $region15: #{tpu_custom_call.1} parent=11 // pred_region
          _
        $region16: #{tpu_custom_call.1} parent=11 // pred_fallthru
          _
      $region12: #{tpu_custom_call.1} parent=5 // pred_fallthru
        _
      %p102 = scmp.lt.s32.totalorder %s11, 2
      // Predicated region
      $region17: #{tpu_custom_call.1} parent=5 // pred_check
        %p103 = pneg %p102
      $region18: #{tpu_custom_call.1} parent=5 // pred_check_branch
        %105 = sbr.rel (%p103) target = $region20
      $region19: #{tpu_custom_call.1} parent=5 // pred_region
        // Predicated region
        $region21: #{tpu_custom_call.1} parent=19 // pred_check
          %p106 = pneg %p31
        $region22: #{tpu_custom_call.1} parent=19 // pred_check_branch
          %108 = sbr.rel (%p106) target = $region24
        $region23: #{tpu_custom_call.1} parent=19 // pred_region
          %p109 = scmp.lt.s32.totalorder %s11, 1
          %s110 = scalar_select %p109, %s11, 1
          %s111 = smul.addr %s110, 10
          %s112 = smul.addr %s111, 4
          %s113 = scalar_lea.vmem %s0, %s112
        $region24: #{tpu_custom_call.1} parent=19 // pred_fallthru
          _
      $region20: #{tpu_custom_call.1} parent=5 // pred_fallthru
        _
      %p114 = scmp.le.s32.totalorder 1, %s11
      %p115 = scmp.lt.s32.totalorder %s11, 3
      %p116 = pnand %p114, %p115
      %p117 = pneg %p116
      // Predicated region
      $region25: #{tpu_custom_call.1} parent=5 // pred_check
        _
      $region26: #{tpu_custom_call.1} parent=5 // pred_check_branch
        %119 = sbr.rel (%p116) target = $region28
      $region27: #{tpu_custom_call.1} parent=5 // pred_region
        %s120 = ssub.s32 %s11, 1
        %p121 = scmp.lt.s32.totalorder %s16, 1
        %s122 = scalar_select %p121, %s16, 1
        %s123 = smul.addr %s122, 10
        %s124 = smul.addr %s123, 4
        %s125 = scalar_lea.vmem %s0, %s124
        %p126 = pneg %p37
        %p127 = pneg %p34
        %p128 = pneg %p58
        %p129 = pneg %p55
        %p130 = pneg %p84
        %p131 = pneg %p81
        %s132 = sand.u32 %s71, 1
        %s133 = scalar_lea.sflag [#allocation3], %s132
        %s134 = sand.u32 %s71, 1
        %s135 = smul.addr %s134, 8
        %s136 = scalar_lea.vmem [#allocation2], %s135
        %p137 = scmp.lt.s32.totalorder %s16, 1
        %s138 = scalar_select %p137, %s16, 1
        %s139 = smul.addr %s138, 10
        %s140 = smul.addr %s139, 4
        %s141 = scalar_lea.vmem %s0, %s140
        %v143 = vld [vmem:[%s1] sm:$0xf]
        %v144 = vld [vmem:[%s141] sm:$0xf]
        %v145 = vld [vmem:[%s141 + $0x4] sm:$0xf]
        %v146 = vld [vmem:[%s141 + $0x8] sm:$0xf]
        %v147 = vld [vmem:[%s141 + $0xc] sm:$0xf]
        %v148 = vld [vmem:[%s141 + $0x10] sm:$0xf]
        %v149 = vld [vmem:[%s141 + $0x14] sm:$0xf]
        %v150 = vld [vmem:[%s141 + $0x18] sm:$0xf]
        %v151 = vld [vmem:[%s141 + $0x1c] sm:$0xf]
        %v152 = vld [vmem:[%s141 + $0x20] sm:$0xf]
        %v153 = vld [vmem:[%s141 + $0x24] sm:$0xf]
        %v164 = vunpack.c.l.b16 %v144
        %v165 = vunpack.c.l.b16 %v145
        %v166 = vunpack.c.l.b16 %v146
        %v167 = vunpack.c.l.b16 %v147
        %v168 = vunpack.c.l.b16 %v148
        %v169 = vunpack.c.l.b16 %v149
        %v170 = vunpack.c.l.b16 %v150
        %v171 = vunpack.c.l.b16 %v151
        %v172 = vunpack.c.l.b16 %v152
        %v173 = vunpack.c.l.b16 %v153
        %v174 = vpack.c.b16 %v165, %v164
        %v175 = vpack.c.b16 %v167, %v166
        %v176 = vpack.c.b16 %v169, %v168
        %v177 = vpack.c.b16 %v171, %v170
        %v178 = vpack.c.b16 %v173, %v172
        %vm184 = vcmask 654336
        %v186 = vsel %vm184, %v143, 0
        %188 = vmatprep.subr.bf16.mxu0 0
        %189 = vmatpush1.bf16.msra.mxu0 %v174
        %190 = vmatprep.subr.bf16.mxu0 0
        %191 = vmatpush1.bf16.msra.mxu0 %v175
        %192 = vmatprep.subr.bf16.mxu0 0
        %193 = vmatpush1.bf16.msra.mxu0 %v176
        %194 = vmatprep.subr.bf16.mxu0 0
        %195 = vmatpush1.bf16.msra.mxu0 %v177
        %196 = vmatprep.subr.bf16.mxu0 0
        %197 = vmatpush1.bf16.msra.mxu0 %v178
        %198 = vmatprep.subr.bf16.mxu0 0
        %199 = vmatpush1.bf16.msra.mxu0 0
        %200 = vmatprep.subr.bf16.mxu0 0
        %201 = vmatpush1.bf16.msra.mxu0 0
        %202 = vmatprep.subr.bf16.mxu0 0
        %203 = vmatpush1.bf16.msra.mxu0 0
        %204 = vmatprep.subr.bf16.mxu0 0
        %205 = vmatpush1.bf16.msra.mxu0 0
        %206 = vmatprep.subr.bf16.mxu0 0
        %207 = vmatpush1.bf16.msra.mxu0 0
        %208 = vmatprep.subr.bf16.mxu0 0
        %209 = vmatpush1.bf16.msra.mxu0 0
        %210 = vmatprep.subr.bf16.mxu0 0
        %211 = vmatpush1.bf16.msra.mxu0 0
        %212 = vmatprep.subr.bf16.mxu0 0
        %213 = vmatpush1.bf16.msra.mxu0 0
        %214 = vmatprep.subr.bf16.mxu0 0
        %215 = vmatpush1.bf16.msra.mxu0 0
        %216 = vmatprep.subr.bf16.mxu0 0
        %217 = vmatpush1.bf16.msra.mxu0 0
        %218 = vmatprep.subr.bf16.mxu0 0
        %219 = vmatpush1.bf16.msra.mxu0 0
        %220 = vmatprep.mubr.bf16.mxu0 0
        %221 = vmatmul.mubr.bf16.gmra.mrb[0].mxu0 %v186
        %v222 = vpop.f32.mrb[0].mxu0
        %v223 = vadd.f32 0.0, %v222
        %v224 = vpop.f32.mrb[0].mxu0
        %v225 = vpop.f32.mrb[0].mxu0
        %v226 = vpop.f32.mrb[0].mxu0
        %227 = vdwg.mxu0
        %vm228 = vcmask 523264
        %229 = vst.msk [vmem:[%s136] sm:$0xff] %vm228, %v223
        %s230 = sand.u32 %s71, 1
        %s231 = scalar_lea.sflag [#allocation3], %s230
        %s232 = sand.u32 %s71, 1
        %s233 = smul.addr %s232, 8
        %s234 = scalar_lea.vmem [#allocation2], %s233
        // Predicated region
        $region29: #{tpu_custom_call.1} parent=27 // pred_check
          %p235 = pneg %p81
        $region30: #{tpu_custom_call.1} parent=27 // pred_check_branch
          %237 = sbr.rel (%p235) target = $region32
        $region31: #{tpu_custom_call.1} parent=27 // pred_region
          %s239 = ssub.s32 128, 128
          %240 = vsyncadd %s231, %s239
          %s241 = smul.addr %s16, 128
          %s242 = scalar_lea.hbm %s2, %s241
          %s244 = sshll.u32 %s234, 4
          %s245 = int_to_ptr.vmem [resolvable:$true] %s244
          %247 = dma.vmem_to_hbm [thread:$0]  %s245, 128, %s242, %s231
        $region32: #{tpu_custom_call.1} parent=27 // pred_fallthru
          _
      $region28: #{tpu_custom_call.1} parent=5 // pred_fallthru
        _
      %p248 = scmp.le.s32.totalorder 2, %s11
      // Predicated region
      $region33: #{tpu_custom_call.1} parent=5 // pred_check
        %p249 = pneg %p248
      $region34: #{tpu_custom_call.1} parent=5 // pred_check_branch
        %251 = sbr.rel (%p249) target = $region36
      $region35: #{tpu_custom_call.1} parent=5 // pred_region
        %s252 = ssub.s32 %s11, 2
        // Predicated region
        $region37: #{tpu_custom_call.1} parent=35 // pred_check
          %p253 = pneg %p87
        $region38: #{tpu_custom_call.1} parent=35 // pred_check_branch
          %255 = sbr.rel (%p253) target = $region40
        $region39: #{tpu_custom_call.1} parent=35 // pred_region
          %s256 = sand.u32 %s72, 1
          %s257 = scalar_lea.sflag [#allocation3], %s256
          %s258 = sand.u32 %s72, 1
          %s259 = smul.addr %s258, 8
          %s260 = scalar_lea.vmem [#allocation2], %s259
          %261 = dma.done %s257, 128
        $region40: #{tpu_custom_call.1} parent=35 // pred_fallthru
          _
      $region36: #{tpu_custom_call.1} parent=5 // pred_fallthru
        _
    $region6: #{tpu_custom_call.1} parent=1 // loop_footer
      %s15 = sadd.s32 1, %s11
    $region7: #{tpu_custom_call.1} parent=1 // loop_footer_branch
      %10 = sbr.rel target = $region3
    $region8: #{tpu_custom_call.1} parent=1 // loop_exit
      _
    %262 = vsyncpa [#allocation3], 1
    %s263 = scalar_lea.sflag [#allocation3], 1
    %264 = vsyncpa %s263, 1

</llo_original>
